<compile_context>
chip_gen: v6e
topology: v6e:2x2x1
jax: 0.10.0
libtpu: 0.0.40
codegen_flags: <defaults>
</compile_context>

<pallas_src>
import functools

import jax
import jax.numpy as jnp
from jax.experimental import pallas as pl
from jax.experimental.pallas import tpu as pltpu

_HIDDEN = 128          # every layer is zero-padded to 128 output lanes


def _round_up(n, m):
    return (n + m - 1) // m * m


def encoder_kernel(x_ref, w_ref, b_ref, o_ref, *, d_in, latent_dim, compute_dtype):
    """Fused 4-layer MLP for one batch tile.

    x_ref : (tb, d_in)              input tile (any float dtype)
    w_ref : (d_in + 3*128, 128)     packed, zero-padded weights (compute_dtype)
    b_ref : (4, 128)                packed, zero-padded biases (f32)
    o_ref : (tb, latent_dim)        live output lanes only
    """
    f32 = jnp.float32
    x = x_ref[...].astype(compute_dtype)

    # Static row offsets into the packed weight slab (all multiples of 8).
    w1 = w_ref[0:d_in, :]
    w2 = w_ref[d_in:d_in + _HIDDEN, :]
    w3 = w_ref[d_in + _HIDDEN:d_in + 2 * _HIDDEN, :]
    w4 = w_ref[d_in + 2 * _HIDDEN:d_in + 3 * _HIDDEN, :]

    # bf16 operands on the MXU, f32 accumulation, bias-add + tanh in f32.
    # Padded lanes stay exactly zero through all layers because the padded
    # weights/biases are zero and tanh(0) == 0 (fragile if the activation is
    # ever changed to something non-zero-preserving).
    h = jnp.tanh(jnp.dot(x, w1, preferred_element_type=f32)
                 + b_ref[0:1, :]).astype(compute_dtype)
    h = jnp.tanh(jnp.dot(h, w2, preferred_element_type=f32)
                 + b_ref[1:2, :]).astype(compute_dtype)
    h = jnp.tanh(jnp.dot(h, w3, preferred_element_type=f32)
                 + b_ref[2:3, :]).astype(compute_dtype)
    y = jnp.dot(h, w4, preferred_element_type=f32) + b_ref[3:4, :]

    # Store only the live latent lanes; the (B,128)->(B,latent) HBM writeback
    # shrink is the big win on this memory-bound kernel.
    o_ref[...] = y[:, :latent_dim].astype(o_ref.dtype)


def pack_encoder_params(params, compute_dtype=jnp.bfloat16):
    """Zero-pad every layer to 128 output lanes and pack into two buffers.

    Call ONCE at parameter-creation time (hoisted out of the forward path)."""
    (w1, b1), (w2, b2), (w3, b3), (w4, b4) = params
    origin_dim = w1.shape[0]
    d_in = _round_up(origin_dim, 8)

    def pad_w(w, rows):
        r, c = w.shape
        return jnp.pad(w, ((0, rows - r), (0, _HIDDEN - c))).astype(compute_dtype)

    def pad_b(b):
        b = jnp.reshape(b, (1, -1))
        return jnp.pad(b, ((0, 0), (0, _HIDDEN - b.shape[-1])))

    w_packed = jnp.concatenate(
        [pad_w(w1, d_in), pad_w(w2, _HIDDEN), pad_w(w3, _HIDDEN), pad_w(w4, _HIDDEN)],
        axis=0)                                                   # (d_in+384, 128)
    b_packed = jnp.concatenate(
        [pad_b(b1), pad_b(b2), pad_b(b3), pad_b(b4)], axis=0
    ).astype(jnp.float32)                                         # (4, 128)
    return w_packed, b_packed


@functools.partial(jax.jit,
                   static_argnames=("latent_dim", "block_b", "compute_dtype"))
def encoder_forward(x, w_packed, b_packed, *, latent_dim, block_b=512,
                    compute_dtype=jnp.bfloat16):
    """Run the fused encoder kernel, tiling over the batch dimension."""
    B, origin_dim = x.shape
    d_in = w_packed.shape[0] - 3 * _HIDDEN
    assert origin_dim <= d_in, (origin_dim, d_in)
    if origin_dim != d_in:                       # keep slab slice offsets aligned
        x = jnp.pad(x, ((0, 0), (0, d_in - origin_dim)))

    # Grid depth: target ~8 grid steps (so both v7x TCs get >=2 steps each and
    # the DMA pipeline engages on v5e/v6e), with a 128-row floor to amortize
    # per-step overhead and a block_b cap.
    tb = min(block_b, max(128, _round_up(pl.cdiv(B, 8), 8)))
    tb = min(tb, _round_up(B, 8))
    grid = (pl.cdiv(B, tb),)

    return pl.pallas_call(
        functools.partial(encoder_kernel, d_in=d_in, latent_dim=latent_dim,
                          compute_dtype=compute_dtype),
        out_shape=jax.ShapeDtypeStruct((B, latent_dim), jnp.float32),
        grid_spec=pltpu.PrefetchScalarGridSpec(
            num_scalar_prefetch=0,
            grid=grid,
            in_specs=[
                pl.BlockSpec((tb, d_in), lambda i: (i, 0)),        # x batch tile
                pl.BlockSpec(w_packed.shape, lambda i: (0, 0)),    # packed weights
                pl.BlockSpec(b_packed.shape, lambda i: (0, 0)),    # packed biases
            ],
            out_specs=pl.BlockSpec((tb, latent_dim), lambda i: (i, 0)),
        ),
        compiler_params=pltpu.CompilerParams(
            dimension_semantics=("parallel",)),
    )(x, w_packed, b_packed)


def init_linear(key, fan_in, fan_out, dtype=jnp.float32):
    """PyTorch nn.Linear default init (uniform +/- 1/sqrt(fan_in)).

    W is returned already transposed to (fan_in, fan_out); b is (1, fan_out)."""
    kw, kb = jax.random.split(key)
    bound = 1.0 / jnp.sqrt(jnp.float32(fan_in))
    w = jax.random.uniform(kw, (fan_in, fan_out), dtype, -bound, bound)
    b = jax.random.uniform(kb, (1, fan_out), dtype, -bound, bound)
    return w, b


def init_encoder_params(key, origin_dim, latent_dim):
    k1, k2, k3, k4 = jax.random.split(key, 4)
    return (
        init_linear(k1, origin_dim, 128),
        init_linear(k2, 128, 64),
        init_linear(k3, 64, 32),
        init_linear(k4, 32, latent_dim),
    )


def encoder_reference_bf16(x, params, compute_dtype=jnp.bfloat16):
    """Pure-JAX reference with the same precision policy as the kernel."""
    f32 = jnp.float32

    def layer(h, w, b, act):
        y = jnp.dot(h.astype(compute_dtype), w.astype(compute_dtype),
                    preferred_element_type=f32) + b.astype(f32)
        return jnp.tanh(y) if act else y

    (w1, b1), (w2, b2), (w3, b3), (w4, b4) = params
    h = layer(x, w1, b1, True)
    h = layer(h, w2, b2, True)
    h = layer(h, w3, b3, True)
    return layer(h, w4, b4, False)


def encoder_reference_f32(x, params):
    """Full-f32 reference identical to the PyTorch forward."""
    (w1, b1), (w2, b2), (w3, b3), (w4, b4) = params
    h = jnp.tanh(x @ w1 + b1)
    h = jnp.tanh(h @ w2 + b2)
    h = jnp.tanh(h @ w3 + b3)
    return h @ w4 + b4


if __name__ == "__main__":
    key = jax.random.PRNGKey(0)
    k_x, k_p = jax.random.split(key)

    batch = 256
    origin_dim = 64
    latent_dim = 16

    x = jax.random.normal(k_x, (batch, origin_dim), dtype=jnp.float32)
    params = init_encoder_params(k_p, origin_dim, latent_dim)

    # Pack/pad/cast the parameters ONCE, outside the forward path.
    w_packed, b_packed = pack_encoder_params(params, jnp.bfloat16)

    out = jax.block_until_ready(
        encoder_forward(x, w_packed, b_packed, latent_dim=latent_dim))

    ref_bf16 = encoder_reference_bf16(x, params)   # same precision policy
    ref_f32 = encoder_reference_f32(x, params)     # original f32 semantics

    assert out.shape == (batch, latent_dim), out.shape
    assert jnp.allclose(out, ref_bf16, atol=1e-2, rtol=1e-2), float(
        jnp.max(jnp.abs(out - ref_bf16)))
    assert jnp.allclose(out, ref_f32, atol=5e-2, rtol=5e-2), float(
        jnp.max(jnp.abs(out - ref_f32)))

    print("KERNEL_OK")
</pallas_src>

<mosaic_0001>
module attributes {stable_mosaic.version = 11 : i64} {
  func.func @encoder_kernel(%arg0: i32, %arg1: memref<128x64xf32, #tpu.memory_space<vmem>>, %arg2: memref<448x128xbf16, #tpu.memory_space<vmem>>, %arg3: memref<4x128xf32, #tpu.memory_space<vmem>>, %arg4: memref<128x16xf32, #tpu.memory_space<vmem>>) attributes {dimension_semantics = [#tpu.dimension_semantics<parallel>], iteration_bounds = array<i64: 2>, scalar_prefetch = 0 : i64, scratch_operands = 0 : i64, tpu.core_type = #tpu.core_type<tc>, window_params = [{transform_indices = @transform_0, window_bounds = array<i64: 128, 64>}, {pipeline_mode = #tpu.pipeline_mode<synchronous>, transform_indices = @transform_1, window_bounds = array<i64: 448, 128>}, {pipeline_mode = #tpu.pipeline_mode<synchronous>, transform_indices = @transform_2, window_bounds = array<i64: 4, 128>}, {transform_indices = @transform_3, window_bounds = array<i64: 128, 16>}]} {
    %c0 = arith.constant 0 : index
    %c0_0 = arith.constant 0 : index
    %0 = vector.load %arg1[%c0, %c0_0] : memref<128x64xf32, #tpu.memory_space<vmem>>, vector<128x64xf32>
    %1 = arith.truncf %0 : vector<128x64xf32> to vector<128x64xbf16>
    %c0_1 = arith.constant 0 : index
    %c0_2 = arith.constant 0 : index
    %2 = vector.load %arg2[%c0_1, %c0_2] : memref<448x128xbf16, #tpu.memory_space<vmem>>, vector<64x128xbf16>
    %c64 = arith.constant 64 : index
    %c0_3 = arith.constant 0 : index
    %3 = vector.load %arg2[%c64, %c0_3] : memref<448x128xbf16, #tpu.memory_space<vmem>>, vector<128x128xbf16>
    %c192 = arith.constant 192 : index
    %c0_4 = arith.constant 0 : index
    %4 = vector.load %arg2[%c192, %c0_4] : memref<448x128xbf16, #tpu.memory_space<vmem>>, vector<128x128xbf16>
    %c320 = arith.constant 320 : index
    %c0_5 = arith.constant 0 : index
    %5 = vector.load %arg2[%c320, %c0_5] : memref<448x128xbf16, #tpu.memory_space<vmem>>, vector<128x128xbf16>
    %cst = arith.constant dense<0.000000e+00> : vector<128x128xf32>
    %6 = tpu.matmul %1, %2, %cst {dimension_numbers = #tpu.dot_dimension_numbers<[1], [0], [0], [1], [0, 0, 1, 1], [], []>} : vector<128x64xbf16>, vector<64x128xbf16>, vector<128x128xf32> -> vector<128x128xf32>
    %c0_6 = arith.constant 0 : index
    %c0_7 = arith.constant 0 : index
    %7 = vector.load %arg3[%c0_6, %c0_7] : memref<4x128xf32, #tpu.memory_space<vmem>>, vector<1x128xf32>
    %8 = vector.broadcast %7 : vector<1x128xf32> to vector<128x128xf32>
    %9 = arith.addf %6, %8 : vector<128x128xf32>
    %10 = math.tanh %9 : vector<128x128xf32>
    %11 = arith.truncf %10 : vector<128x128xf32> to vector<128x128xbf16>
    %cst_8 = arith.constant dense<0.000000e+00> : vector<128x128xf32>
    %12 = tpu.matmul %11, %3, %cst_8 {dimension_numbers = #tpu.dot_dimension_numbers<[1], [0], [0], [1], [0, 0, 1, 1], [], []>} : vector<128x128xbf16>, vector<128x128xbf16>, vector<128x128xf32> -> vector<128x128xf32>
    %c1 = arith.constant 1 : index
    %c0_9 = arith.constant 0 : index
    %13 = vector.load %arg3[%c1, %c0_9] : memref<4x128xf32, #tpu.memory_space<vmem>>, vector<1x128xf32>
    %14 = vector.broadcast %13 : vector<1x128xf32> to vector<128x128xf32>
    %15 = arith.addf %12, %14 : vector<128x128xf32>
    %16 = math.tanh %15 : vector<128x128xf32>
    %17 = arith.truncf %16 : vector<128x128xf32> to vector<128x128xbf16>
    %cst_10 = arith.constant dense<0.000000e+00> : vector<128x128xf32>
    %18 = tpu.matmul %17, %4, %cst_10 {dimension_numbers = #tpu.dot_dimension_numbers<[1], [0], [0], [1], [0, 0, 1, 1], [], []>} : vector<128x128xbf16>, vector<128x128xbf16>, vector<128x128xf32> -> vector<128x128xf32>
    %c2 = arith.constant 2 : index
    %c0_11 = arith.constant 0 : index
    %19 = vector.load %arg3[%c2, %c0_11] : memref<4x128xf32, #tpu.memory_space<vmem>>, vector<1x128xf32>
    %20 = vector.broadcast %19 : vector<1x128xf32> to vector<128x128xf32>
    %21 = arith.addf %18, %20 : vector<128x128xf32>
    %22 = math.tanh %21 : vector<128x128xf32>
    %23 = arith.truncf %22 : vector<128x128xf32> to vector<128x128xbf16>
    %cst_12 = arith.constant dense<0.000000e+00> : vector<128x128xf32>
    %24 = tpu.matmul %23, %5, %cst_12 {dimension_numbers = #tpu.dot_dimension_numbers<[1], [0], [0], [1], [0, 0, 1, 1], [], []>} : vector<128x128xbf16>, vector<128x128xbf16>, vector<128x128xf32> -> vector<128x128xf32>
    %c3 = arith.constant 3 : index
    %c0_13 = arith.constant 0 : index
    %25 = vector.load %arg3[%c3, %c0_13] : memref<4x128xf32, #tpu.memory_space<vmem>>, vector<1x128xf32>
    %26 = vector.broadcast %25 : vector<1x128xf32> to vector<128x128xf32>
    %27 = arith.addf %24, %26 : vector<128x128xf32>
    %28 = vector.extract_strided_slice %27 {offsets = [0, 0], sizes = [128, 16], strides = [1, 1]} : vector<128x128xf32> to vector<128x16xf32>
    %c0_14 = arith.constant 0 : index
    %c0_15 = arith.constant 0 : index
    %29 = vector.load %arg4[%c0_14, %c0_15] : memref<128x16xf32, #tpu.memory_space<vmem>>, vector<128x16xf32>
    tpu.vector_store %arg4[%c0_14, %c0_15], %28 {strides = array<i32>} : memref<128x16xf32, #tpu.memory_space<vmem>>, vector<128x16xf32>,
    return
  }
  func.func @transform_0(%arg0: i32) -> (i32, i32) {
    %c0_i32 = arith.constant 0 : i32
    %c0_i32_0 = arith.constant 0 : i32
    return %arg0, %c0_i32 : i32, i32
  }
  func.func @transform_1(%arg0: i32) -> (i32, i32) {
    %c0_i32 = arith.constant 0 : i32
    %c0_i32_0 = arith.constant 0 : i32
    %c0_i32_1 = arith.constant 0 : i32
    return %c0_i32, %c0_i32_0 : i32, i32
  }
  func.func @transform_2(%arg0: i32) -> (i32, i32) {
    %c0_i32 = arith.constant 0 : i32
    %c0_i32_0 = arith.constant 0 : i32
    %c0_i32_1 = arith.constant 0 : i32
    return %c0_i32, %c0_i32_0 : i32, i32
  }
  func.func @transform_3(%arg0: i32) -> (i32, i32) {
    %c0_i32 = arith.constant 0 : i32
    %c0_i32_0 = arith.constant 0 : i32
    return %arg0, %c0_i32 : i32, i32
  }
}

</mosaic_0001>

<llo_original>
// kernel: encoder_forward.1
$region0: #{encoder_forward.1}
  #allocation0 [shape = 'u32[]', space=smem, size = 0x4, offset = 0x4, fixed_abs, tag = 'smem constant byte address 0x4 - core index']
  #allocation1 [shape = 'u32[144,128]{1,0:T(1,128)}', space=vmem, size = 0x12000, scoped, tag = 'internal scratch']
  %s0 = inlined_call_operand.vmem [shape: f32[256,64], index: 0, kind: input, shape index: {}]
  %s1 = inlined_call_operand.vmem [shape: bf16[448,128], index: 1, kind: input, shape index: {}]
  %s2 = inlined_call_operand.vmem [shape: f32[4,128], index: 2, kind: input, shape index: {}]
  %s3 = inlined_call_operand.vmem [shape: f32[256,16], index: 3, kind: output, shape index: {}]
  %s4 = sld [smem:[#allocation0]]
  $region45: #{encoder_forward.1} parent=0
    _
  %s6 = ssub.s32 1, %s4
  %s7 = scalar_select 0, %s6, %s4
  loop: start=0, step=1, limit=4
  $region2: #{encoder_forward.1} parent=0 // loop_pre_header
    _
  $region3: #{encoder_forward.1} parent=0 // loop_header
    %s9 = sphi 0, %s13
    %p10 = scmp.ge.s32.totalorder %s9, 4
    %s19 = sphi 0, %s21
    %s22 = sphi 0, %s19
    %s23 = sphi 0, %s22
    %s39 = sphi 0, %s23
    %s43 = sphi 0, %s43
    %s45 = sphi 0, %s43
    %s46 = sphi 0, %s45
    %s60 = sphi 0, %s46
    %s64 = sphi 0, %s64
    %s66 = sphi 0, %s64
    %s67 = sphi 0, %s66
    %s81 = sphi 0, %s67
    %s87 = sphi 0, %s89
    %s90 = sphi 0, %s87
    %s91 = sphi 0, %s90
    %s107 = sphi 0, %s91
  $region4: #{encoder_forward.1} parent=0 // loop_header_branch
    %12 = sbr.rel (%p10) target = $region8
  $region5: #{encoder_forward.1} parent=0 // loop_body
    %s14 = ssub.s32 %s9, 1
    %s15 = ssub.s32 %s9, 2
    %s16 = sadd.s32 %s9, 1
    %s17 = ssub.s32 %s9, %s16
    %p18 = scmp.eq.s32.totalorder %s17, 0
    %s20 = sadd.s32 %s19, 1
    %s21 = scalar_select %p18, %s19, %s20
    %p24 = pneg %p18
    %p25 = scmp.eq.s32.totalorder %s9, 1
    %p26 = por %p24, %p25
    %p27 = scmp.ne.s32.totalorder %s19, %s22
    %p28 = scmp.eq.s32.totalorder %s9, 0
    %p29 = por %p27, %p28
    %p30 = scmp.ne.s32.totalorder %s19, %s22
    %p31 = scmp.eq.s32.totalorder %s14, 1
    %p32 = por %p30, %p31
    %p33 = scmp.ne.s32.totalorder %s22, %s23
    %p34 = scmp.eq.s32.totalorder %s14, 0
    %p35 = por %p33, %p34
    %p36 = scmp.ne.s32.totalorder %s22, %s23
    %p37 = scmp.eq.s32.totalorder %s15, 1
    %p38 = por %p36, %p37
    %p40 = scmp.ne.s32.totalorder %s23, %s39
    %p41 = scmp.eq.s32.totalorder %s15, 0
    %p42 = por %p40, %p41
    %s44 = sadd.s32 %s43, 1
    %p47 = scmp.eq.s32.totalorder %s9, 1
    %p48 = scmp.ne.s32.totalorder %s43, %s45
    %p49 = scmp.eq.s32.totalorder %s9, 0
    %p50 = por %p48, %p49
    %p51 = scmp.ne.s32.totalorder %s43, %s45
    %p52 = scmp.eq.s32.totalorder %s14, 1
    %p53 = por %p51, %p52
    %p54 = scmp.ne.s32.totalorder %s45, %s46
    %p55 = scmp.eq.s32.totalorder %s14, 0
    %p56 = por %p54, %p55
    %p57 = scmp.ne.s32.totalorder %s45, %s46
    %p58 = scmp.eq.s32.totalorder %s15, 1
    %p59 = por %p57, %p58
    %p61 = scmp.ne.s32.totalorder %s46, %s60
    %p62 = scmp.eq.s32.totalorder %s15, 0
    %p63 = por %p61, %p62
    %s65 = sadd.s32 %s64, 1
    %p68 = scmp.eq.s32.totalorder %s9, 1
    %p69 = scmp.ne.s32.totalorder %s64, %s66
    %p70 = scmp.eq.s32.totalorder %s9, 0
    %p71 = por %p69, %p70
    %p72 = scmp.ne.s32.totalorder %s64, %s66
    %p73 = scmp.eq.s32.totalorder %s14, 1
    %p74 = por %p72, %p73
    %p75 = scmp.ne.s32.totalorder %s66, %s67
    %p76 = scmp.eq.s32.totalorder %s14, 0
    %p77 = por %p75, %p76
    %p78 = scmp.ne.s32.totalorder %s66, %s67
    %p79 = scmp.eq.s32.totalorder %s15, 1
    %p80 = por %p78, %p79
    %p82 = scmp.ne.s32.totalorder %s67, %s81
    %p83 = scmp.eq.s32.totalorder %s15, 0
    %p84 = por %p82, %p83
    %s85 = ssub.s32 %s9, %s16
    %p86 = scmp.eq.s32.totalorder %s85, 0
    %s88 = sadd.s32 %s87, 1
    %s89 = scalar_select %p86, %s87, %s88
    %p92 = pneg %p86
    %p93 = scmp.eq.s32.totalorder %s9, 1
    %p94 = por %p92, %p93
    %p95 = scmp.ne.s32.totalorder %s87, %s90
    %p96 = scmp.eq.s32.totalorder %s9, 0
    %p97 = por %p95, %p96
    %p98 = scmp.ne.s32.totalorder %s87, %s90
    %p99 = scmp.eq.s32.totalorder %s14, 1
    %p100 = por %p98, %p99
    %p101 = scmp.ne.s32.totalorder %s90, %s91
    %p102 = scmp.eq.s32.totalorder %s14, 0
    %p103 = por %p101, %p102
    %p104 = scmp.ne.s32.totalorder %s90, %s91
    %p105 = scmp.eq.s32.totalorder %s15, 1
    %p106 = por %p104, %p105
    %p108 = scmp.ne.s32.totalorder %s91, %s107
    %p109 = scmp.eq.s32.totalorder %s15, 0
    %p110 = por %p108, %p109
    %p111 = scmp.le.s32.totalorder 1, %s9
    %p112 = scmp.lt.s32.totalorder %s9, 3
    %p113 = pnand %p111, %p112
    %p114 = pneg %p113
    // Predicated region
    $region9: #{encoder_forward.1} parent=5 // pred_check
      _
    $region10: #{encoder_forward.1} parent=5 // pred_check_branch
      %116 = sbr.rel (%p113) target = $region12
    $region11: #{encoder_forward.1} parent=5 // pred_region
      %s117 = ssub.s32 %s9, 1
      // Predicated region
      $region13: #{encoder_forward.1} parent=11 // pred_check
        %p118 = pneg %p56
      $region14: #{encoder_forward.1} parent=11 // pred_check_branch
        %120 = sbr.rel (%p118) target = $region16
      $region15: #{encoder_forward.1} parent=11 // pred_region
        _
      $region16: #{encoder_forward.1} parent=11 // pred_fallthru
        _
      // Predicated region
      $region17: #{encoder_forward.1} parent=11 // pred_check
        %p121 = pneg %p77
      $region18: #{encoder_forward.1} parent=11 // pred_check_branch
        %123 = sbr.rel (%p121) target = $region20
      $region19: #{encoder_forward.1} parent=11 // pred_region
        _
      $region20: #{encoder_forward.1} parent=11 // pred_fallthru
        _
    $region12: #{encoder_forward.1} parent=5 // pred_fallthru
      _
    %p124 = scmp.lt.s32.totalorder %s9, 2
    // Predicated region
    $region21: #{encoder_forward.1} parent=5 // pred_check
      %p125 = pneg %p124
    $region22: #{encoder_forward.1} parent=5 // pred_check_branch
      %127 = sbr.rel (%p125) target = $region24
    $region23: #{encoder_forward.1} parent=5 // pred_region
      // Predicated region
      $region25: #{encoder_forward.1} parent=23 // pred_check
        %p128 = pneg %p29
      $region26: #{encoder_forward.1} parent=23 // pred_check_branch
        %130 = sbr.rel (%p128) target = $region28
      $region27: #{encoder_forward.1} parent=23 // pred_region
        %s131 = smul.u32 16, %s9
        %p132 = scmp.lt.s32.totalorder %s131, 31
        %s133 = scalar_select %p132, %s131, 31
        %s134 = smul.addr %s133, 8
        %s135 = scalar_lea.vmem %s0, %s134
        %s136 = smul.u32 16, %s9
      $region28: #{encoder_forward.1} parent=23 // pred_fallthru
        _
    $region24: #{encoder_forward.1} parent=5 // pred_fallthru
      _
    %p137 = scmp.le.s32.totalorder 1, %s9
    %p138 = scmp.lt.s32.totalorder %s9, 3
    %p139 = pnand %p137, %p138
    %p140 = pneg %p139
    // Predicated region
    $region29: #{encoder_forward.1} parent=5 // pred_check
      _
    $region30: #{encoder_forward.1} parent=5 // pred_check_branch
      %142 = sbr.rel (%p139) target = $region32
    $region31: #{encoder_forward.1} parent=5 // pred_region
      %s143 = ssub.s32 %s9, 1
      %s144 = smul.u32 16, %s14
      %p145 = scmp.lt.s32.totalorder %s144, 31
      %s146 = scalar_select %p145, %s144, 31
      %s147 = smul.addr %s146, 8
      %s148 = scalar_lea.vmem %s0, %s147
      %p149 = pneg %p35
      %p150 = pneg %p32
      %p151 = pneg %p56
      %p152 = pneg %p53
      %p153 = pneg %p77
      %p154 = pneg %p74
      %p155 = pneg %p103
      %p156 = pneg %p100
      %s157 = smul.u32 16, %s14
      %p158 = scmp.lt.s32.totalorder %s157, 31
      %s159 = scalar_select %p158, %s157, 31
      %s160 = smul.addr %s159, 8
      %s161 = scalar_lea.vmem %s3, %s160
      %s162 = smul.u32 16, %s14
      %p163 = scmp.lt.s32.totalorder %s162, 31
      %s164 = scalar_select %p163, %s162, 31
      %s165 = smul.addr %s164, 8
      %s166 = scalar_lea.vmem %s0, %s165
      %s167 = smul.u32 16, %s14
      %s168 = smul.u32 16, %s14
      %p169 = scmp.lt.s32.totalorder %s168, 31
      %s170 = scalar_select %p169, %s168, 31
      %s171 = smul.addr %s170, 8
      %s172 = scalar_lea.vmem %s3, %s171
      %s173 = smul.u32 16, %s14
      %v175 = vld [vmem:[%s166] sm:$0xff]
      %v176 = vld [vmem:[%s166 + $0x8] sm:$0xff]
      %v177 = vld [vmem:[%s166 + $0x10] sm:$0xff]
      %v178 = vld [vmem:[%s166 + $0x18] sm:$0xff]
      %v179 = vld [vmem:[%s166 + $0x20] sm:$0xff]
      %v180 = vld [vmem:[%s166 + $0x28] sm:$0xff]
      %v181 = vld [vmem:[%s166 + $0x30] sm:$0xff]
      %v182 = vld [vmem:[%s166 + $0x38] sm:$0xff]
      %v183 = vld [vmem:[%s166 + $0x40] sm:$0xff]
      %v184 = vld [vmem:[%s166 + $0x48] sm:$0xff]
      %v185 = vld [vmem:[%s166 + $0x50] sm:$0xff]
      %v186 = vld [vmem:[%s166 + $0x58] sm:$0xff]
      %v187 = vld [vmem:[%s166 + $0x60] sm:$0xff]
      %v188 = vld [vmem:[%s166 + $0x68] sm:$0xff]
      %v189 = vld [vmem:[%s166 + $0x70] sm:$0xff]
      %v190 = vld [vmem:[%s166 + $0x78] sm:$0xff]
      %v191 = vpack.c.bf16 %v176, %v175
      %v192 = vpack.c.bf16 %v178, %v177
      %v193 = vpack.c.bf16 %v180, %v179
      %v194 = vpack.c.bf16 %v182, %v181
      %v195 = vpack.c.bf16 %v184, %v183
      %v196 = vpack.c.bf16 %v186, %v185
      %v197 = vpack.c.bf16 %v188, %v187
      %v198 = vpack.c.bf16 %v190, %v189
      %v199 = vld [vmem:[%s1] sm:$0xf]
      %v200 = vld [vmem:[%s1 + $0x4] sm:$0xf]
      %v201 = vld [vmem:[%s1 + $0x8] sm:$0xf]
      %v202 = vld [vmem:[%s1 + $0xc] sm:$0xf]
      %v203 = vld [vmem:[%s1 + $0x10] sm:$0xf]
      %v204 = vld [vmem:[%s1 + $0x14] sm:$0xf]
      %v205 = vld [vmem:[%s1 + $0x18] sm:$0xf]
      %v206 = vld [vmem:[%s1 + $0x1c] sm:$0xf]
      %v207 = vld [vmem:[%s1 + $0x20] sm:$0xf]
      %v208 = vld [vmem:[%s1 + $0x24] sm:$0xf]
      %v209 = vld [vmem:[%s1 + $0x28] sm:$0xf]
      %v210 = vld [vmem:[%s1 + $0x2c] sm:$0xf]
      %v211 = vld [vmem:[%s1 + $0x30] sm:$0xf]
      %v212 = vld [vmem:[%s1 + $0x34] sm:$0xf]
      %v213 = vld [vmem:[%s1 + $0x38] sm:$0xf]
      %v214 = vld [vmem:[%s1 + $0x3c] sm:$0xf]
      %v215 = vld [vmem:[%s1 + $0x40] sm:$0xf]
      %v216 = vld [vmem:[%s1 + $0x44] sm:$0xf]
      %v217 = vld [vmem:[%s1 + $0x48] sm:$0xf]
      %v218 = vld [vmem:[%s1 + $0x4c] sm:$0xf]
      %v219 = vld [vmem:[%s1 + $0x50] sm:$0xf]
      %v220 = vld [vmem:[%s1 + $0x54] sm:$0xf]
      %v221 = vld [vmem:[%s1 + $0x58] sm:$0xf]
      %v222 = vld [vmem:[%s1 + $0x5c] sm:$0xf]
      %v223 = vld [vmem:[%s1 + $0x60] sm:$0xf]
      %v224 = vld [vmem:[%s1 + $0x64] sm:$0xf]
      %v225 = vld [vmem:[%s1 + $0x68] sm:$0xf]
      %v226 = vld [vmem:[%s1 + $0x6c] sm:$0xf]
      %v227 = vld [vmem:[%s1 + $0x70] sm:$0xf]
      %v228 = vld [vmem:[%s1 + $0x74] sm:$0xf]
      %v229 = vld [vmem:[%s1 + $0x78] sm:$0xf]
      %v230 = vld [vmem:[%s1 + $0x7c] sm:$0xf]
      %v231 = vld [vmem:[%s1 + $0x80] sm:$0xf]
      %v232 = vld [vmem:[%s1 + $0x84] sm:$0xf]
      %v233 = vld [vmem:[%s1 + $0x88] sm:$0xf]
      %v234 = vld [vmem:[%s1 + $0x8c] sm:$0xf]
      %v235 = vld [vmem:[%s1 + $0x90] sm:$0xf]
      %v236 = vld [vmem:[%s1 + $0x94] sm:$0xf]
      %v237 = vld [vmem:[%s1 + $0x98] sm:$0xf]
      %v238 = vld [vmem:[%s1 + $0x9c] sm:$0xf]
      %v239 = vld [vmem:[%s1 + $0xa0] sm:$0xf]
      %v240 = vld [vmem:[%s1 + $0xa4] sm:$0xf]
      %v241 = vld [vmem:[%s1 + $0xa8] sm:$0xf]
      %v242 = vld [vmem:[%s1 + $0xac] sm:$0xf]
      %v243 = vld [vmem:[%s1 + $0xb0] sm:$0xf]
      %v244 = vld [vmem:[%s1 + $0xb4] sm:$0xf]
      %v245 = vld [vmem:[%s1 + $0xb8] sm:$0xf]
      %v246 = vld [vmem:[%s1 + $0xbc] sm:$0xf]
      %v247 = vld [vmem:[%s1 + $0xc0] sm:$0xf]
      %v248 = vld [vmem:[%s1 + $0xc4] sm:$0xf]
      %v249 = vld [vmem:[%s1 + $0xc8] sm:$0xf]
      %v250 = vld [vmem:[%s1 + $0xcc] sm:$0xf]
      %v251 = vld [vmem:[%s1 + $0xd0] sm:$0xf]
      %v252 = vld [vmem:[%s1 + $0xd4] sm:$0xf]
      %v253 = vld [vmem:[%s1 + $0xd8] sm:$0xf]
      %v254 = vld [vmem:[%s1 + $0xdc] sm:$0xf]
      %v255 = vld [vmem:[%s2] sm:$0x1]
      %v256 = vlaneseq
      %v257 = vshrl.u32 %v256, 7
      %v258 = vsub.s32 0, %v257
      %v259 = vrot.slane %v255, %v258
      %v268 = vunpack.c.l.b16 %v199
      %v269 = vunpack.c.l.b16 %v200
      %v270 = vunpack.c.l.b16 %v201
      %v271 = vunpack.c.l.b16 %v202
      %v272 = vunpack.c.l.b16 %v203
      %v273 = vunpack.c.l.b16 %v204
      %v274 = vunpack.c.l.b16 %v205
      %v275 = vunpack.c.l.b16 %v206
      %v276 = vpack.c.b16 %v269, %v268
      %v277 = vpack.c.b16 %v271, %v270
      %v278 = vpack.c.b16 %v273, %v272
      %v279 = vpack.c.b16 %v275, %v274
      %vm284 = vcmask 523264
      %v286 = vsel %vm284, %v191, 0
      %v289 = vsel %vm284, %v192, 0
      %v292 = vsel %vm284, %v193, 0
      %v295 = vsel %vm284, %v194, 0
      %v298 = vsel %vm284, %v195, 0
      %v301 = vsel %vm284, %v196, 0
      %v304 = vsel %vm284, %v197, 0
      %v307 = vsel %vm284, %v198, 0
      %309 = vmatprep.subr.bf16.mxu0 0
      %310 = vmatpush1.bf16.msra.mxu0 0
      %311 = vmatprep.subr.bf16.mxu0 0
      %312 = vmatpush1.bf16.msra.mxu0 0
      %313 = vmatprep.subr.bf16.mxu0 0
      %314 = vmatpush1.bf16.msra.mxu0 0
      %315 = vmatprep.subr.bf16.mxu0 0
      %316 = vmatpush1.bf16.msra.mxu0 0
      %317 = vmatprep.subr.bf16.mxu0 0
      %318 = vmatpush1.bf16.msra.mxu0 %v279
      %319 = vmatprep.subr.bf16.mxu0 0
      %320 = vmatpush1.bf16.msra.mxu0 %v278
      %321 = vmatprep.subr.bf16.mxu0 0
      %322 = vmatpush1.bf16.msra.mxu0 %v277
      %323 = vmatprep.subr.bf16.mxu0 0
      %324 = vmatpush1.bf16.msra.mxu0 %v276
      %325 = vmatprep.subr.bf16.mxu0 0
      %326 = vmatpush2.bf16.msra.mxu0 0
      %327 = vmatprep.subr.bf16.mxu0 0
      %328 = vmatpush2.bf16.msra.mxu0 0
      %329 = vmatprep.subr.bf16.mxu0 0
      %330 = vmatpush2.bf16.msra.mxu0 0
      %331 = vmatprep.subr.bf16.mxu0 0
      %332 = vmatpush2.bf16.msra.mxu0 0
      %333 = vmatprep.subr.bf16.mxu0 0
      %334 = vmatpush2.bf16.msra.mxu0 0
      %335 = vmatprep.subr.bf16.mxu0 0
      %336 = vmatpush2.bf16.msra.mxu0 0
      %337 = vmatprep.subr.bf16.mxu0 0
      %338 = vmatpush2.bf16.msra.mxu0 0
      %339 = vmatprep.subr.bf16.mxu0 0
      %340 = vmatpush2.bf16.msra.mxu0 0
      %341 = vmatprep.mubr.bf16.mxu0 0
      %342 = vmatmul.mubr.bf16.gmra.mxu0 %v286
      %v343 = vpop.f32.mrf.mxu0
      %v344 = vadd.f32 %v259, %v343
      %v345 = vpop.f32.mrf.mxu0
      %v346 = vpop.f32.mrf.mxu0
      %v347 = vadd.f32 %v259, %v346
      %v348 = vpop.f32.mrf.mxu0
      %349 = vmatprep.mubr.bf16.mxu0 0
      %350 = vmatmul.mubr.bf16.gmra.mxu0 %v289
      %v351 = vpop.f32.mrf.mxu0
      %v352 = vadd.f32 %v259, %v351
      %v353 = vpop.f32.mrf.mxu0
      %v354 = vpop.f32.mrf.mxu0
      %v355 = vadd.f32 %v259, %v354
      %v356 = vpop.f32.mrf.mxu0
      %357 = vmatprep.mubr.bf16.mxu0 0
      %358 = vmatmul.mubr.bf16.gmra.mxu0 %v292
      %v359 = vpop.f32.mrf.mxu0
      %v360 = vadd.f32 %v259, %v359
      %v361 = vpop.f32.mrf.mxu0
      %v362 = vpop.f32.mrf.mxu0
      %v363 = vadd.f32 %v259, %v362
      %v364 = vpop.f32.mrf.mxu0
      %365 = vmatprep.mubr.bf16.mxu0 0
      %366 = vmatmul.mubr.bf16.gmra.mxu0 %v295
      %v367 = vpop.f32.mrf.mxu0
      %v368 = vadd.f32 %v259, %v367
      %v369 = vpop.f32.mrf.mxu0
      %v370 = vpop.f32.mrf.mxu0
      %v371 = vadd.f32 %v259, %v370
      %v372 = vpop.f32.mrf.mxu0
      %373 = vmatprep.mubr.bf16.mxu0 0
      %374 = vmatmul.mubr.bf16.gmra.mxu0 %v298
      %v375 = vpop.f32.mrf.mxu0
      %v376 = vadd.f32 %v259, %v375
      %v377 = vpop.f32.mrf.mxu0
      %v378 = vpop.f32.mrf.mxu0
      %v379 = vadd.f32 %v259, %v378
      %v380 = vpop.f32.mrf.mxu0
      %381 = vmatprep.mubr.bf16.mxu0 0
      %382 = vmatmul.mubr.bf16.gmra.mxu0 %v301
      %v383 = vpop.f32.mrf.mxu0
      %v384 = vadd.f32 %v259, %v383
      %v385 = vpop.f32.mrf.mxu0
      %v386 = vpop.f32.mrf.mxu0
      %v387 = vadd.f32 %v259, %v386
      %v388 = vpop.f32.mrf.mxu0
      %389 = vmatprep.mubr.bf16.mxu0 0
      %390 = vmatmul.mubr.bf16.gmra.mxu0 %v304
      %v391 = vpop.f32.mrf.mxu0
      %v392 = vadd.f32 %v259, %v391
      %v393 = vpop.f32.mrf.mxu0
      %v394 = vpop.f32.mrf.mxu0
      %v395 = vadd.f32 %v259, %v394
      %v396 = vpop.f32.mrf.mxu0
      %397 = vmatprep.mubr.bf16.mxu0 0
      %398 = vmatmul.mubr.bf16.gmra.mxu0 %v307
      %v399 = vpop.f32.mrf.mxu0
      %v400 = vadd.f32 %v259, %v399
      %v401 = vpop.f32.mrf.mxu0
      %v402 = vpop.f32.mrf.mxu0
      %v403 = vadd.f32 %v259, %v402
      %v404 = vpop.f32.mrf.mxu0
      %405 = vdwg.mxu0
      %v406 = vtanh.pop %v344
      %v407 = vtanh.pop %v347
      %v408 = vtanh.pop %v352
      %v409 = vtanh.pop %v355
      %v410 = vtanh.pop %v360
      %v411 = vtanh.pop %v363
      %v412 = vtanh.pop %v368
      %v413 = vtanh.pop %v371
      %v414 = vtanh.pop %v376
      %v415 = vtanh.pop %v379
      %v416 = vtanh.pop %v384
      %v417 = vtanh.pop %v387
      %v418 = vtanh.pop %v392
      %v419 = vtanh.pop %v395
      %v420 = vtanh.pop %v400
      %v421 = vtanh.pop %v403
      %v422 = vpack.c.bf16 %v407, %v406
      %v423 = vpack.c.bf16 %v409, %v408
      %v424 = vpack.c.bf16 %v411, %v410
      %v425 = vpack.c.bf16 %v413, %v412
      %v426 = vpack.c.bf16 %v415, %v414
      %v427 = vpack.c.bf16 %v417, %v416
      %v428 = vpack.c.bf16 %v419, %v418
      %v429 = vpack.c.bf16 %v421, %v420
      %v430 = vld [vmem:[%s2 + $0x1] sm:$0x1]
      %v431 = vlaneseq
      %v432 = vshrl.u32 %v431, 7
      %v433 = vsub.s32 0, %v432
      %v434 = vrot.slane %v430, %v433
      %v451 = vunpack.c.l.b16 %v207
      %v452 = vunpack.c.l.b16 %v208
      %v453 = vunpack.c.l.b16 %v209
      %v454 = vunpack.c.l.b16 %v210
      %v455 = vunpack.c.l.b16 %v211
      %v456 = vunpack.c.l.b16 %v212
      %v457 = vunpack.c.l.b16 %v213
      %v458 = vunpack.c.l.b16 %v214
      %v459 = vunpack.c.l.b16 %v215
      %v460 = vunpack.c.l.b16 %v216
      %v461 = vunpack.c.l.b16 %v217
      %v462 = vunpack.c.l.b16 %v218
      %v463 = vunpack.c.l.b16 %v219
      %v464 = vunpack.c.l.b16 %v220
      %v465 = vunpack.c.l.b16 %v221
      %v466 = vunpack.c.l.b16 %v222
      %v467 = vpack.c.b16 %v452, %v451
      %v468 = vpack.c.b16 %v454, %v453
      %v469 = vpack.c.b16 %v456, %v455
      %v470 = vpack.c.b16 %v458, %v457
      %v471 = vpack.c.b16 %v460, %v459
      %v472 = vpack.c.b16 %v462, %v461
      %v473 = vpack.c.b16 %v464, %v463
      %v474 = vpack.c.b16 %v466, %v465
      %483 = vmatprep.subr.bf16.mxu0 0
      %484 = vmatpush1.bf16.msra.mxu0 %v474
      %485 = vmatprep.subr.bf16.mxu0 0
      %486 = vmatpush1.bf16.msra.mxu0 %v473
      %487 = vmatprep.subr.bf16.mxu0 0
      %488 = vmatpush1.bf16.msra.mxu0 %v472
      %489 = vmatprep.subr.bf16.mxu0 0
      %490 = vmatpush1.bf16.msra.mxu0 %v471
      %491 = vmatprep.subr.bf16.mxu0 0
      %492 = vmatpush1.bf16.msra.mxu0 %v470
      %493 = vmatprep.subr.bf16.mxu0 0
      %494 = vmatpush1.bf16.msra.mxu0 %v469
      %495 = vmatprep.subr.bf16.mxu0 0
      %496 = vmatpush1.bf16.msra.mxu0 %v468
      %497 = vmatprep.subr.bf16.mxu0 0
      %498 = vmatpush1.bf16.msra.mxu0 %v467
      %499 = vmatprep.subr.bf16.mxu0 0
      %500 = vmatpush2.bf16.msra.mxu0 0
      %501 = vmatprep.subr.bf16.mxu0 0
      %502 = vmatpush2.bf16.msra.mxu0 0
      %503 = vmatprep.subr.bf16.mxu0 0
      %504 = vmatpush2.bf16.msra.mxu0 0
      %505 = vmatprep.subr.bf16.mxu0 0
      %506 = vmatpush2.bf16.msra.mxu0 0
      %507 = vmatprep.subr.bf16.mxu0 0
      %508 = vmatpush2.bf16.msra.mxu0 0
      %509 = vmatprep.subr.bf16.mxu0 0
      %510 = vmatpush2.bf16.msra.mxu0 0
      %511 = vmatprep.subr.bf16.mxu0 0
      %512 = vmatpush2.bf16.msra.mxu0 0
      %513 = vmatprep.subr.bf16.mxu0 0
      %514 = vmatpush2.bf16.msra.mxu0 0
      %515 = vmatprep.mubr.bf16.mxu0 0
      %516 = vmatmul.mubr.bf16.gmra.mxu0 %v422
      %v517 = vpop.f32.mrf.mxu0
      %v518 = vadd.f32 %v434, %v517
      %v519 = vpop.f32.mrf.mxu0
      %v520 = vpop.f32.mrf.mxu0
      %v521 = vadd.f32 %v434, %v520
      %v522 = vpop.f32.mrf.mxu0
      %523 = vmatprep.mubr.bf16.mxu0 0
      %524 = vmatmul.mubr.bf16.gmra.mxu0 %v423
      %v525 = vpop.f32.mrf.mxu0
      %v526 = vadd.f32 %v434, %v525
      %v527 = vpop.f32.mrf.mxu0
      %v528 = vpop.f32.mrf.mxu0
      %v529 = vadd.f32 %v434, %v528
      %v530 = vpop.f32.mrf.mxu0
      %531 = vmatprep.mubr.bf16.mxu0 0
      %532 = vmatmul.mubr.bf16.gmra.mxu0 %v424
      %v533 = vpop.f32.mrf.mxu0
      %v534 = vadd.f32 %v434, %v533
      %v535 = vpop.f32.mrf.mxu0
      %v536 = vpop.f32.mrf.mxu0
      %v537 = vadd.f32 %v434, %v536
      %v538 = vpop.f32.mrf.mxu0
      %539 = vmatprep.mubr.bf16.mxu0 0
      %540 = vmatmul.mubr.bf16.gmra.mxu0 %v425
      %v541 = vpop.f32.mrf.mxu0
      %v542 = vadd.f32 %v434, %v541
      %v543 = vpop.f32.mrf.mxu0
      %v544 = vpop.f32.mrf.mxu0
      %v545 = vadd.f32 %v434, %v544
      %v546 = vpop.f32.mrf.mxu0
      %547 = vmatprep.mubr.bf16.mxu0 0
      %548 = vmatmul.mubr.bf16.gmra.mxu0 %v426
      %v549 = vpop.f32.mrf.mxu0
      %v550 = vadd.f32 %v434, %v549
      %v551 = vpop.f32.mrf.mxu0
      %v552 = vpop.f32.mrf.mxu0
      %v553 = vadd.f32 %v434, %v552
      %v554 = vpop.f32.mrf.mxu0
      %555 = vmatprep.mubr.bf16.mxu0 0
      %556 = vmatmul.mubr.bf16.gmra.mxu0 %v427
      %v557 = vpop.f32.mrf.mxu0
      %v558 = vadd.f32 %v434, %v557
      %v559 = vpop.f32.mrf.mxu0
      %v560 = vpop.f32.mrf.mxu0
      %v561 = vadd.f32 %v434, %v560
      %v562 = vpop.f32.mrf.mxu0
      %563 = vmatprep.mubr.bf16.mxu0 0
      %564 = vmatmul.mubr.bf16.gmra.mxu0 %v428
      %v565 = vpop.f32.mrf.mxu0
      %v566 = vadd.f32 %v434, %v565
      %v567 = vpop.f32.mrf.mxu0
      %v568 = vpop.f32.mrf.mxu0
      %v569 = vadd.f32 %v434, %v568
      %v570 = vpop.f32.mrf.mxu0
      %571 = vmatprep.mubr.bf16.mxu0 0
      %572 = vmatmul.mubr.bf16.gmra.mxu0 %v429
      %v573 = vpop.f32.mrf.mxu0
      %v574 = vadd.f32 %v434, %v573
      %v575 = vpop.f32.mrf.mxu0
      %v576 = vpop.f32.mrf.mxu0
      %v577 = vadd.f32 %v434, %v576
      %v578 = vpop.f32.mrf.mxu0
      %579 = vdwg.mxu0
      %v580 = vtanh.pop %v518
      %v581 = vtanh.pop %v521
      %v582 = vtanh.pop %v526
      %v583 = vtanh.pop %v529
      %v584 = vtanh.pop %v534
      %v585 = vtanh.pop %v537
      %v586 = vtanh.pop %v542
      %v587 = vtanh.pop %v545
      %v588 = vtanh.pop %v550
      %v589 = vtanh.pop %v553
      %v590 = vtanh.pop %v558
      %v591 = vtanh.pop %v561
      %v592 = vtanh.pop %v566
      %v593 = vtanh.pop %v569
      %v594 = vtanh.pop %v574
      %v595 = vtanh.pop %v577
      %v596 = vpack.c.bf16 %v581, %v580
      %v597 = vpack.c.bf16 %v583, %v582
      %v598 = vpack.c.bf16 %v585, %v584
      %v599 = vpack.c.bf16 %v587, %v586
      %v600 = vpack.c.bf16 %v589, %v588
      %v601 = vpack.c.bf16 %v591, %v590
      %v602 = vpack.c.bf16 %v593, %v592
      %v603 = vpack.c.bf16 %v595, %v594
      %v604 = vld [vmem:[%s2 + $0x2] sm:$0x1]
      %v605 = vlaneseq
      %v606 = vshrl.u32 %v605, 7
      %v607 = vsub.s32 0, %v606
      %v608 = vrot.slane %v604, %v607
      %v625 = vunpack.c.l.b16 %v223
      %v626 = vunpack.c.l.b16 %v224
      %v627 = vunpack.c.l.b16 %v225
      %v628 = vunpack.c.l.b16 %v226
      %v629 = vunpack.c.l.b16 %v227
      %v630 = vunpack.c.l.b16 %v228
      %v631 = vunpack.c.l.b16 %v229
      %v632 = vunpack.c.l.b16 %v230
      %v633 = vunpack.c.l.b16 %v231
      %v634 = vunpack.c.l.b16 %v232
      %v635 = vunpack.c.l.b16 %v233
      %v636 = vunpack.c.l.b16 %v234
      %v637 = vunpack.c.l.b16 %v235
      %v638 = vunpack.c.l.b16 %v236
      %v639 = vunpack.c.l.b16 %v237
      %v640 = vunpack.c.l.b16 %v238
      %v641 = vpack.c.b16 %v626, %v625
      %v642 = vpack.c.b16 %v628, %v627
      %v643 = vpack.c.b16 %v630, %v629
      %v644 = vpack.c.b16 %v632, %v631
      %v645 = vpack.c.b16 %v634, %v633
      %v646 = vpack.c.b16 %v636, %v635
      %v647 = vpack.c.b16 %v638, %v637
      %v648 = vpack.c.b16 %v640, %v639
      %657 = vmatprep.subr.bf16.mxu0 0
      %658 = vmatpush1.bf16.msra.mxu0 %v648
      %659 = vmatprep.subr.bf16.mxu0 0
      %660 = vmatpush1.bf16.msra.mxu0 %v647
      %661 = vmatprep.subr.bf16.mxu0 0
      %662 = vmatpush1.bf16.msra.mxu0 %v646
      %663 = vmatprep.subr.bf16.mxu0 0
      %664 = vmatpush1.bf16.msra.mxu0 %v645
      %665 = vmatprep.subr.bf16.mxu0 0
      %666 = vmatpush1.bf16.msra.mxu0 %v644
      %667 = vmatprep.subr.bf16.mxu0 0
      %668 = vmatpush1.bf16.msra.mxu0 %v643
      %669 = vmatprep.subr.bf16.mxu0 0
      %670 = vmatpush1.bf16.msra.mxu0 %v642
      %671 = vmatprep.subr.bf16.mxu0 0
      %672 = vmatpush1.bf16.msra.mxu0 %v641
      %673 = vmatprep.subr.bf16.mxu0 0
      %674 = vmatpush2.bf16.msra.mxu0 0
      %675 = vmatprep.subr.bf16.mxu0 0
      %676 = vmatpush2.bf16.msra.mxu0 0
      %677 = vmatprep.subr.bf16.mxu0 0
      %678 = vmatpush2.bf16.msra.mxu0 0
      %679 = vmatprep.subr.bf16.mxu0 0
      %680 = vmatpush2.bf16.msra.mxu0 0
      %681 = vmatprep.subr.bf16.mxu0 0
      %682 = vmatpush2.bf16.msra.mxu0 0
      %683 = vmatprep.subr.bf16.mxu0 0
      %684 = vmatpush2.bf16.msra.mxu0 0
      %685 = vmatprep.subr.bf16.mxu0 0
      %686 = vmatpush2.bf16.msra.mxu0 0
      %687 = vmatprep.subr.bf16.mxu0 0
      %688 = vmatpush2.bf16.msra.mxu0 0
      %689 = vmatprep.mubr.bf16.mxu0 0
      %690 = vmatmul.mubr.bf16.gmra.mxu0 %v596
      %v691 = vpop.f32.mrf.mxu0
      %v692 = vadd.f32 %v608, %v691
      %v693 = vpop.f32.mrf.mxu0
      %v694 = vpop.f32.mrf.mxu0
      %v695 = vadd.f32 %v608, %v694
      %v696 = vpop.f32.mrf.mxu0
      %697 = vmatprep.mubr.bf16.mxu0 0
      %698 = vmatmul.mubr.bf16.gmra.mxu0 %v597
      %v699 = vpop.f32.mrf.mxu0
      %v700 = vadd.f32 %v608, %v699
      %v701 = vpop.f32.mrf.mxu0
      %v702 = vpop.f32.mrf.mxu0
      %v703 = vadd.f32 %v608, %v702
      %v704 = vpop.f32.mrf.mxu0
      %705 = vmatprep.mubr.bf16.mxu0 0
      %706 = vmatmul.mubr.bf16.gmra.mxu0 %v598
      %v707 = vpop.f32.mrf.mxu0
      %v708 = vadd.f32 %v608, %v707
      %v709 = vpop.f32.mrf.mxu0
      %v710 = vpop.f32.mrf.mxu0
      %v711 = vadd.f32 %v608, %v710
      %v712 = vpop.f32.mrf.mxu0
      %713 = vmatprep.mubr.bf16.mxu0 0
      %714 = vmatmul.mubr.bf16.gmra.mxu0 %v599
      %v715 = vpop.f32.mrf.mxu0
      %v716 = vadd.f32 %v608, %v715
      %v717 = vpop.f32.mrf.mxu0
      %v718 = vpop.f32.mrf.mxu0
      %v719 = vadd.f32 %v608, %v718
      %v720 = vpop.f32.mrf.mxu0
      %721 = vmatprep.mubr.bf16.mxu0 0
      %722 = vmatmul.mubr.bf16.gmra.mxu0 %v600
      %v723 = vpop.f32.mrf.mxu0
      %v724 = vadd.f32 %v608, %v723
      %v725 = vpop.f32.mrf.mxu0
      %v726 = vpop.f32.mrf.mxu0
      %v727 = vadd.f32 %v608, %v726
      %v728 = vpop.f32.mrf.mxu0
      %729 = vmatprep.mubr.bf16.mxu0 0
      %730 = vmatmul.mubr.bf16.gmra.mxu0 %v601
      %v731 = vpop.f32.mrf.mxu0
      %v732 = vadd.f32 %v608, %v731
      %v733 = vpop.f32.mrf.mxu0
      %v734 = vpop.f32.mrf.mxu0
      %v735 = vadd.f32 %v608, %v734
      %v736 = vpop.f32.mrf.mxu0
      %737 = vmatprep.mubr.bf16.mxu0 0
      %738 = vmatmul.mubr.bf16.gmra.mxu0 %v602
      %v739 = vpop.f32.mrf.mxu0
      %v740 = vadd.f32 %v608, %v739
      %v741 = vpop.f32.mrf.mxu0
      %v742 = vpop.f32.mrf.mxu0
      %v743 = vadd.f32 %v608, %v742
      %v744 = vpop.f32.mrf.mxu0
      %745 = vmatprep.mubr.bf16.mxu0 0
      %746 = vmatmul.mubr.bf16.gmra.mxu0 %v603
      %v747 = vpop.f32.mrf.mxu0
      %v748 = vadd.f32 %v608, %v747
      %v749 = vpop.f32.mrf.mxu0
      %v750 = vpop.f32.mrf.mxu0
      %v751 = vadd.f32 %v608, %v750
      %v752 = vpop.f32.mrf.mxu0
      %753 = vdwg.mxu0
      %v754 = vtanh.pop %v692
      %v755 = vtanh.pop %v695
      %v756 = vtanh.pop %v700
      %v757 = vtanh.pop %v703
      %v758 = vtanh.pop %v708
      %v759 = vtanh.pop %v711
      %v760 = vtanh.pop %v716
      %v761 = vtanh.pop %v719
      %v762 = vtanh.pop %v724
      %v763 = vtanh.pop %v727
      %v764 = vtanh.pop %v732
      %v765 = vtanh.pop %v735
      %v766 = vtanh.pop %v740
      %v767 = vtanh.pop %v743
      %v768 = vtanh.pop %v748
      %v769 = vtanh.pop %v751
      %v770 = vpack.c.bf16 %v755, %v754
      %v771 = vpack.c.bf16 %v757, %v756
      %v772 = vpack.c.bf16 %v759, %v758
      %v773 = vpack.c.bf16 %v761, %v760
      %v774 = vpack.c.bf16 %v763, %v762
      %v775 = vpack.c.bf16 %v765, %v764
      %v776 = vpack.c.bf16 %v767, %v766
      %v777 = vpack.c.bf16 %v769, %v768
      %v778 = vld [vmem:[%s2 + $0x3] sm:$0x1]
      %v779 = vlaneseq
      %v780 = vshrl.u32 %v779, 7
      %v781 = vsub.s32 0, %v780
      %v782 = vrot.slane %v778, %v781
      %v799 = vunpack.c.l.b16 %v239
      %v800 = vunpack.c.l.b16 %v240
      %v801 = vunpack.c.l.b16 %v241
      %v802 = vunpack.c.l.b16 %v242
      %v803 = vunpack.c.l.b16 %v243
      %v804 = vunpack.c.l.b16 %v244
      %v805 = vunpack.c.l.b16 %v245
      %v806 = vunpack.c.l.b16 %v246
      %v807 = vunpack.c.l.b16 %v247
      %v808 = vunpack.c.l.b16 %v248
      %v809 = vunpack.c.l.b16 %v249
      %v810 = vunpack.c.l.b16 %v250
      %v811 = vunpack.c.l.b16 %v251
      %v812 = vunpack.c.l.b16 %v252
      %v813 = vunpack.c.l.b16 %v253
      %v814 = vunpack.c.l.b16 %v254
      %v815 = vpack.c.b16 %v800, %v799
      %v816 = vpack.c.b16 %v802, %v801
      %v817 = vpack.c.b16 %v804, %v803
      %v818 = vpack.c.b16 %v806, %v805
      %v819 = vpack.c.b16 %v808, %v807
      %v820 = vpack.c.b16 %v810, %v809
      %v821 = vpack.c.b16 %v812, %v811
      %v822 = vpack.c.b16 %v814, %v813
      %831 = vmatprep.subr.bf16.mxu0 0
      %832 = vmatpush1.bf16.msra.mxu0 %v822
      %833 = vmatprep.subr.bf16.mxu0 0
      %834 = vmatpush1.bf16.msra.mxu0 %v821
      %835 = vmatprep.subr.bf16.mxu0 0
      %836 = vmatpush1.bf16.msra.mxu0 %v820
      %837 = vmatprep.subr.bf16.mxu0 0
      %838 = vmatpush1.bf16.msra.mxu0 %v819
      %839 = vmatprep.subr.bf16.mxu0 0
      %840 = vmatpush1.bf16.msra.mxu0 %v818
      %841 = vmatprep.subr.bf16.mxu0 0
      %842 = vmatpush1.bf16.msra.mxu0 %v817
      %843 = vmatprep.subr.bf16.mxu0 0
      %844 = vmatpush1.bf16.msra.mxu0 %v816
      %845 = vmatprep.subr.bf16.mxu0 0
      %846 = vmatpush1.bf16.msra.mxu0 %v815
      %847 = vmatprep.subr.bf16.mxu0 0
      %848 = vmatpush2.bf16.msra.mxu0 0
      %849 = vmatprep.subr.bf16.mxu0 0
      %850 = vmatpush2.bf16.msra.mxu0 0
      %851 = vmatprep.subr.bf16.mxu0 0
      %852 = vmatpush2.bf16.msra.mxu0 0
      %853 = vmatprep.subr.bf16.mxu0 0
      %854 = vmatpush2.bf16.msra.mxu0 0
      %855 = vmatprep.subr.bf16.mxu0 0
      %856 = vmatpush2.bf16.msra.mxu0 0
      %857 = vmatprep.subr.bf16.mxu0 0
      %858 = vmatpush2.bf16.msra.mxu0 0
      %859 = vmatprep.subr.bf16.mxu0 0
      %860 = vmatpush2.bf16.msra.mxu0 0
      %861 = vmatprep.subr.bf16.mxu0 0
      %862 = vmatpush2.bf16.msra.mxu0 0
      %863 = vmatprep.mubr.bf16.mxu0 0
      %864 = vmatmul.mubr.bf16.gmra.mxu0 %v770
      %v865 = vpop.f32.mrf.mxu0
      %v866 = vadd.f32 %v782, %v865
      %v867 = vpop.f32.mrf.mxu0
      %v868 = vpop.f32.mrf.mxu0
      %v869 = vadd.f32 %v782, %v868
      %v870 = vpop.f32.mrf.mxu0
      %871 = vmatprep.mubr.bf16.mxu0 0
      %872 = vmatmul.mubr.bf16.gmra.mxu0 %v771
      %v873 = vpop.f32.mrf.mxu0
      %v874 = vadd.f32 %v782, %v873
      %v875 = vpop.f32.mrf.mxu0
      %v876 = vpop.f32.mrf.mxu0
      %v877 = vadd.f32 %v782, %v876
      %v878 = vpop.f32.mrf.mxu0
      %879 = vmatprep.mubr.bf16.mxu0 0
      %880 = vmatmul.mubr.bf16.gmra.mxu0 %v772
      %v881 = vpop.f32.mrf.mxu0
      %v882 = vadd.f32 %v782, %v881
      %v883 = vpop.f32.mrf.mxu0
      %v884 = vpop.f32.mrf.mxu0
      %v885 = vadd.f32 %v782, %v884
      %v886 = vpop.f32.mrf.mxu0
      %887 = vmatprep.mubr.bf16.mxu0 0
      %888 = vmatmul.mubr.bf16.gmra.mxu0 %v773
      %v889 = vpop.f32.mrf.mxu0
      %v890 = vadd.f32 %v782, %v889
      %v891 = vpop.f32.mrf.mxu0
      %v892 = vpop.f32.mrf.mxu0
      %v893 = vadd.f32 %v782, %v892
      %v894 = vpop.f32.mrf.mxu0
      %895 = vmatprep.mubr.bf16.mxu0 0
      %896 = vmatmul.mubr.bf16.gmra.mxu0 %v774
      %v897 = vpop.f32.mrf.mxu0
      %v898 = vadd.f32 %v782, %v897
      %v899 = vpop.f32.mrf.mxu0
      %v900 = vpop.f32.mrf.mxu0
      %v901 = vadd.f32 %v782, %v900
      %v902 = vpop.f32.mrf.mxu0
      %903 = vmatprep.mubr.bf16.mxu0 0
      %904 = vmatmul.mubr.bf16.gmra.mxu0 %v775
      %v905 = vpop.f32.mrf.mxu0
      %v906 = vadd.f32 %v782, %v905
      %v907 = vpop.f32.mrf.mxu0
      %v908 = vpop.f32.mrf.mxu0
      %v909 = vadd.f32 %v782, %v908
      %v910 = vpop.f32.mrf.mxu0
      %911 = vmatprep.mubr.bf16.mxu0 0
      %912 = vmatmul.mubr.bf16.gmra.mxu0 %v776
      %v913 = vpop.f32.mrf.mxu0
      %v914 = vadd.f32 %v782, %v913
      %v915 = vpop.f32.mrf.mxu0
      %v916 = vpop.f32.mrf.mxu0
      %v917 = vadd.f32 %v782, %v916
      %v918 = vpop.f32.mrf.mxu0
      %919 = vmatprep.mubr.bf16.mxu0 0
      %920 = vmatmul.mubr.bf16.gmra.mxu0 %v777
      %v921 = vpop.f32.mrf.mxu0
      %v922 = vadd.f32 %v782, %v921
      %v923 = vpop.f32.mrf.mxu0
      %v924 = vpop.f32.mrf.mxu0
      %v925 = vadd.f32 %v782, %v924
      %v926 = vpop.f32.mrf.mxu0
      %927 = vdwg.mxu0
      %vm928 = vcmask 130048
      %929 = vst.msk [vmem:[%s172] sm:$0xff] %vm928, %v866
      %930 = vst.msk [vmem:[%s172 + $0x8] sm:$0xff] %vm928, %v869
      %931 = vst.msk [vmem:[%s172 + $0x10] sm:$0xff] %vm928, %v874
      %932 = vst.msk [vmem:[%s172 + $0x18] sm:$0xff] %vm928, %v877
      %933 = vst.msk [vmem:[%s172 + $0x20] sm:$0xff] %vm928, %v882
      %934 = vst.msk [vmem:[%s172 + $0x28] sm:$0xff] %vm928, %v885
      %935 = vst.msk [vmem:[%s172 + $0x30] sm:$0xff] %vm928, %v890
      %936 = vst.msk [vmem:[%s172 + $0x38] sm:$0xff] %vm928, %v893
      %937 = vst.msk [vmem:[%s172 + $0x40] sm:$0xff] %vm928, %v898
      %938 = vst.msk [vmem:[%s172 + $0x48] sm:$0xff] %vm928, %v901
      %939 = vst.msk [vmem:[%s172 + $0x50] sm:$0xff] %vm928, %v906
      %940 = vst.msk [vmem:[%s172 + $0x58] sm:$0xff] %vm928, %v909
      %941 = vst.msk [vmem:[%s172 + $0x60] sm:$0xff] %vm928, %v914
      %942 = vst.msk [vmem:[%s172 + $0x68] sm:$0xff] %vm928, %v917
      %943 = vst.msk [vmem:[%s172 + $0x70] sm:$0xff] %vm928, %v922
      %944 = vst.msk [vmem:[%s172 + $0x78] sm:$0xff] %vm928, %v925
      %s945 = smul.u32 16, %s14
      %p946 = scmp.lt.s32.totalorder %s945, 31
      %s947 = scalar_select %p946, %s945, 31
      %s948 = smul.addr %s947, 8
      %s949 = scalar_lea.vmem %s3, %s948
      // Predicated region
      $region33: #{encoder_forward.1} parent=31 // pred_check
        %p950 = pneg %p100
      $region34: #{encoder_forward.1} parent=31 // pred_check_branch
        %952 = sbr.rel (%p950) target = $region36
      $region35: #{encoder_forward.1} parent=31 // pred_region
        %s953 = smul.u32 16, %s14
      $region36: #{encoder_forward.1} parent=31 // pred_fallthru
        _
    $region32: #{encoder_forward.1} parent=5 // pred_fallthru
      _
    %p954 = scmp.le.s32.totalorder 2, %s9
    // Predicated region
    $region37: #{encoder_forward.1} parent=5 // pred_check
      %p955 = pneg %p954
    $region38: #{encoder_forward.1} parent=5 // pred_check_branch
      %957 = sbr.rel (%p955) target = $region40
    $region39: #{encoder_forward.1} parent=5 // pred_region
      %s958 = ssub.s32 %s9, 2
      // Predicated region
      $region41: #{encoder_forward.1} parent=39 // pred_check
        %p959 = pneg %p106
      $region42: #{encoder_forward.1} parent=39 // pred_check_branch
        %961 = sbr.rel (%p959) target = $region44
      $region43: #{encoder_forward.1} parent=39 // pred_region
        %s962 = smul.u32 16, %s15
        %p963 = scmp.lt.s32.totalorder %s962, 31
        %s964 = scalar_select %p963, %s962, 31
        %s965 = smul.addr %s964, 8
        %s966 = scalar_lea.vmem %s3, %s965
      $region44: #{encoder_forward.1} parent=39 // pred_fallthru
        _
    $region40: #{encoder_forward.1} parent=5 // pred_fallthru
      _
  $region6: #{encoder_forward.1} parent=0 // loop_footer
    %s13 = sadd.s32 1, %s9
  $region7: #{encoder_forward.1} parent=0 // loop_footer_branch
    %8 = sbr.rel target = $region3
  $region8: #{encoder_forward.1} parent=0 // loop_exit
    _

</llo_original>
